<compile_context>
chip_gen: v5e
topology: v5e:2x2
jax: 0.10.0
libtpu: 0.0.40
codegen_flags: <defaults>
</compile_context>

<pallas_src>
import functools

import jax
import jax.numpy as jnp
from jax.experimental import pallas as pl
from jax.experimental.pallas import tpu as pltpu


# ----------------------------------------------------------------------------
# small helpers
# ----------------------------------------------------------------------------
def _round_up(x, m):
    return ((x + m - 1) // m) * m


def _choose_tile(dim, preferred, align):
    """Largest tile <= preferred that divides dim and is a multiple of align.
    Falls back to the full dimension (always a legal block size)."""
    if dim <= preferred:
        return dim
    t = (preferred // align) * align
    while t >= align:
        if dim % t == 0:
            return t
        t -= align
    return dim


def _ln(x, w, b, eps=1e-5):
    mu = jnp.mean(x, axis=-1, keepdims=True)
    var = jnp.mean((x - mu) ** 2, axis=-1, keepdims=True)
    return (x - mu) * jax.lax.rsqrt(var + eps) * w + b


@functools.lru_cache(maxsize=1)
def _vmem_limit_bytes():
    """~75% of physical VMEM: ~96 MiB on v5e/v6e (128 MiB), ~48 MiB on v7x (64 MiB)."""
    cap = None
    try:
        cap = getattr(pltpu.get_tpu_info(), "vmem_capacity_bytes", None)
    except Exception:
        cap = None
    if not cap:
        cap = 64 * 1024 * 1024  # conservative fallback (v7x physical per-TC)
    return min(int(cap) * 3 // 4, 100 * 1024 * 1024)


def _cparams(semantics):
    return pltpu.CompilerParams(
        dimension_semantics=semantics, vmem_limit_bytes=_vmem_limit_bytes()
    )


# ----------------------------------------------------------------------------
# Tiled matmul (patch embedding GEMM)
# ----------------------------------------------------------------------------
def _matmul_kernel(a_ref, b_ref, o_ref, acc_ref):
    @pl.when(pl.program_id(2) == 0)
    def _():
        acc_ref[...] = jnp.zeros_like(acc_ref)

    acc_ref[...] += jnp.dot(a_ref[...], b_ref[...], preferred_element_type=jnp.float32)

    @pl.when(pl.program_id(2) == pl.num_programs(2) - 1)
    def _():
        o_ref[...] = acc_ref[...].astype(o_ref.dtype)


def pallas_matmul(a, b, *, tm=256, tn=512, tk=1024):
    M, K = a.shape
    K2, N = b.shape
    assert K == K2
    tm = _choose_tile(M, tm, 8)
    tn = _choose_tile(N, tn, 128)
    tk = _choose_tile(K, tk, 128)
    return pl.pallas_call(
        _matmul_kernel,
        out_shape=jax.ShapeDtypeStruct((M, N), a.dtype),
        grid=(M // tm, N // tn, K // tk),
        in_specs=[
            pl.BlockSpec((tm, tk), lambda i, j, k: (i, k)),
            pl.BlockSpec((tk, tn), lambda i, j, k: (k, j)),
        ],
        out_specs=pl.BlockSpec((tm, tn), lambda i, j, k: (i, j)),
        scratch_shapes=[pltpu.VMEM((tm, tn), jnp.float32)],
        compiler_params=_cparams(("parallel", "parallel", "arbitrary")),
    )(a, b)


# ----------------------------------------------------------------------------
# Fused positional-embedding add + ln_pre (row-tiled, f32 math, native-dtype I/O)
# ----------------------------------------------------------------------------
def _posln_kernel(x_ref, pos_ref, w_ref, b_ref, o_ref):
    f32 = jnp.float32
    x = x_ref[0].astype(f32) + pos_ref[...].astype(f32)
    o_ref[0] = _ln(x, w_ref[...].astype(f32), b_ref[...].astype(f32)).astype(o_ref.dtype)


def pallas_pos_layernorm(x3, pos, w, b, *, rows=512):
    B, S, D = x3.shape
    ts = _choose_tile(S, rows, 8)
    tile = pl.BlockSpec((1, ts, D), lambda bb, s: (bb, s, 0))
    return pl.pallas_call(
        _posln_kernel,
        out_shape=jax.ShapeDtypeStruct((B, S, D), x3.dtype),
        grid=(B, S // ts),
        in_specs=[
            tile,
            pl.BlockSpec((ts, D), lambda bb, s: (s, 0)),
            pl.BlockSpec((1, D), lambda bb, s: (0, 0)),
            pl.BlockSpec((1, D), lambda bb, s: (0, 0)),
        ],
        out_specs=tile,
        compiler_params=_cparams(("parallel", "parallel")),
    )(x3, pos, w, b)


# ----------------------------------------------------------------------------
# LN1 + fused QKV projection (one (D, 3D) matmul per row tile, 3 lane-dense outputs)
# ----------------------------------------------------------------------------
def _ln_qkv_kernel(x_ref, lnw_ref, lnb_ref, w_ref, b_ref, q_ref, k_ref, v_ref):
    f32 = jnp.float32
    x = x_ref[...].astype(f32)
    h = _ln(x, lnw_ref[...].astype(f32), lnb_ref[...].astype(f32)).astype(x_ref.dtype)
    qkv = jnp.dot(h, w_ref[...], preferred_element_type=f32) + b_ref[...].astype(f32)
    D = q_ref.shape[-1]
    q_ref[...] = qkv[:, :D].astype(q_ref.dtype)
    k_ref[...] = qkv[:, D:2 * D].astype(k_ref.dtype)
    v_ref[...] = qkv[:, 2 * D:].astype(v_ref.dtype)


def pallas_ln_qkv(x2, lnw, lnb, wqkv, bqkv, *, rows=512):
    # TODO(synk): on v7x with very large D, stream the 3D output columns on an
    # inner grid axis (like pallas_mlp) to shrink the resident QKV weight block.
    R, D = x2.shape
    D3 = wqkv.shape[1]
    tr = _choose_tile(R, rows, 8)
    out_sds = jax.ShapeDtypeStruct((R, D), x2.dtype)
    out_spec = pl.BlockSpec((tr, D), lambda r: (r, 0))
    return pl.pallas_call(
        _ln_qkv_kernel,
        out_shape=(out_sds, out_sds, out_sds),
        grid=(R // tr,),
        in_specs=[
            pl.BlockSpec((tr, D), lambda r: (r, 0)),
            pl.BlockSpec((1, D), lambda r: (0, 0)),
            pl.BlockSpec((1, D), lambda r: (0, 0)),
            pl.BlockSpec((D, D3), lambda r: (0, 0)),
            pl.BlockSpec((1, D3), lambda r: (0, 0)),
        ],
        out_specs=(out_spec, out_spec, out_spec),
        compiler_params=_cparams(("parallel",)),
    )(x2, lnw, lnb, wqkv, bqkv)


# ----------------------------------------------------------------------------
# Attention core: grid=(B, q-tiles); K/V full per batch.
# Per-head softmax(QK^T)V results are written head-contiguously into a (Tq, D)
# VMEM scratch; one K=D matmul applies W_o. Padded keys are masked (static mask).
# Includes the residual add.
# ----------------------------------------------------------------------------
def _attn_kernel(x_ref, q_ref, k_ref, v_ref, wo_ref, bo_ref, o_ref, attn_ref,
                 *, n_head, kv_len):
    f32 = jnp.float32
    x = x_ref[0]                      # (Tq, D) residual input (native dtype)
    q = q_ref[0]                      # (Tq, D)
    k = k_ref[0]                      # (S,  D)
    v = v_ref[0]                      # (S,  D)
    Tq, D = q.shape
    S = k.shape[0]
    hd = D // n_head
    scale = 1.0 / (hd ** 0.5)

    masked = kv_len < S
    if masked:
        col = jax.lax.broadcasted_iota(jnp.int32, (1, S), 1)
        kmask = col < kv_len

    # TODO(synk): head-major (B,H,S,hd) Q/K/V layout would make head selection a
    # leading-dim index (no lane shuffles), at the cost of lane padding when hd<128.
    for hh in range(n_head):
        sl = slice(hh * hd, (hh + 1) * hd)
        qh = q[:, sl] * scale                          # fold scale into small operand
        s = jax.lax.dot_general(
            qh, k[:, sl], (((1,), (1,)), ((), ())), preferred_element_type=f32
        )
        if masked:
            s = jnp.where(kmask, s, -1e30)
        s = s - jnp.max(s, axis=-1, keepdims=True)
        p = jnp.exp(s)
        p = p * pl.reciprocal(jnp.sum(p, axis=-1, keepdims=True), approx=True)
        oh = jnp.dot(p.astype(v.dtype), v[:, sl], preferred_element_type=f32)
        attn_ref[:, sl] = oh.astype(attn_ref.dtype)    # concat heads in VMEM scratch

    out = (
        x.astype(f32)
        + jnp.dot(attn_ref[...], wo_ref[...], preferred_element_type=f32)
        + bo_ref[...].astype(f32)
    )
    o_ref[0] = out.astype(o_ref.dtype)


def pallas_attention(x, q, k, v, wo, bo, *, n_head, kv_len, tq=512):
    B, S, D = x.shape
    tq = _choose_tile(S, tq, 8)
    tile_spec = pl.BlockSpec((1, tq, D), lambda b, i: (b, i, 0))
    full_spec = pl.BlockSpec((1, S, D), lambda b, i: (b, 0, 0))
    return pl.pallas_call(
        functools.partial(_attn_kernel, n_head=n_head, kv_len=kv_len),
        out_shape=jax.ShapeDtypeStruct((B, S, D), x.dtype),
        grid=(B, S // tq),
        in_specs=[
            tile_spec,                                   # x (residual)
            tile_spec,                                   # q
            full_spec,                                   # k (resident across q tiles)
            full_spec,                                   # v
            pl.BlockSpec((D, D), lambda b, i: (0, 0)),   # W_o
            pl.BlockSpec((1, D), lambda b, i: (0, 0)),   # b_o
        ],
        out_specs=tile_spec,
        scratch_shapes=[pltpu.VMEM((tq, D), x.dtype)],   # concatenated head outputs
        compiler_params=_cparams(("parallel", "parallel")),
    )(x, q, k, v, wo, bo)


# ----------------------------------------------------------------------------
# LN2 + MLP (QuickGELU), hidden dimension chunked on the inner grid axis.
# The (rows, 4D) intermediate is never materialized; ln_2 cache stays in the
# model dtype. Includes the residual add.
# ----------------------------------------------------------------------------
def _mlp_kernel(x_ref, ln2w_ref, ln2b_ref, wfc_ref, bfc_ref, wpr_ref, bpr_ref,
                o_ref, h2_ref, acc_ref):
    f32 = jnp.float32
    c = pl.program_id(1)

    @pl.when(c == 0)
    def _():
        x = x_ref[...].astype(f32)
        h2_ref[...] = _ln(
            x, ln2w_ref[...].astype(f32), ln2b_ref[...].astype(f32)
        ).astype(h2_ref.dtype)
        acc_ref[...] = x + bpr_ref[...].astype(f32)      # residual + c_proj bias

    h = jnp.dot(h2_ref[...], wfc_ref[...], preferred_element_type=f32) \
        + bfc_ref[...].astype(f32)
    h = h * jax.nn.sigmoid(1.702 * h)                    # QuickGELU (f32 / EUP)
    acc_ref[...] += jnp.dot(h.astype(wpr_ref.dtype), wpr_ref[...],
                            preferred_element_type=f32)

    @pl.when(c == pl.num_programs(1) - 1)
    def _():
        o_ref[...] = acc_ref[...].astype(o_ref.dtype)


def pallas_mlp(x2, ln2w, ln2b, wfc, bfc, wpr, bpr, *, rows=512, chunk=512):
    R, D = x2.shape
    H = wfc.shape[1]
    tr = _choose_tile(R, rows, 8)
    tc = _choose_tile(H, chunk, 128)
    return pl.pallas_call(
        _mlp_kernel,
        out_shape=jax.ShapeDtypeStruct((R, D), x2.dtype),
        grid=(R // tr, H // tc),
        in_specs=[
            pl.BlockSpec((tr, D), lambda r, c: (r, 0)),   # x
            pl.BlockSpec((1, D), lambda r, c: (0, 0)),    # ln2 w
            pl.BlockSpec((1, D), lambda r, c: (0, 0)),    # ln2 b
            pl.BlockSpec((D, tc), lambda r, c: (0, c)),   # wfc chunk
            pl.BlockSpec((1, tc), lambda r, c: (0, c)),   # bfc chunk
            pl.BlockSpec((tc, D), lambda r, c: (c, 0)),   # wpr chunk
            pl.BlockSpec((1, D), lambda r, c: (0, 0)),    # bpr
        ],
        out_specs=pl.BlockSpec((tr, D), lambda r, c: (r, 0)),
        scratch_shapes=[pltpu.VMEM((tr, D), x2.dtype),    # ln_2(x) cache (model dtype)
                        pltpu.VMEM((tr, D), jnp.float32)],  # f32 accumulator
        compiler_params=_cparams(("parallel", "arbitrary")),
    )(x2, ln2w, ln2b, wfc, bfc, wpr, bpr)


# ----------------------------------------------------------------------------
# ln_post + projection head (tiny: B x D -> B x O)
# ----------------------------------------------------------------------------
def _head_kernel(x_ref, lnw_ref, lnb_ref, proj_ref, o_ref):
    f32 = jnp.float32
    x = x_ref[...].astype(f32)
    h = _ln(x, lnw_ref[...].astype(f32), lnb_ref[...].astype(f32)).astype(proj_ref.dtype)
    o_ref[...] = jnp.dot(h, proj_ref[...], preferred_element_type=f32).astype(o_ref.dtype)


def pallas_head(x0, lnw, lnb, proj):
    B, _ = x0.shape
    O = proj.shape[1]
    return pl.pallas_call(
        _head_kernel,
        out_shape=jax.ShapeDtypeStruct((B, O), x0.dtype),
        compiler_params=_cparams(None),
    )(x0, lnw, lnb, proj)


# ----------------------------------------------------------------------------
# Parameter init (deterministic synthetic; mirrors the PyTorch module shapes,
# with QKV pre-fused and weights stored transposed so kernels compute x @ W)
# ----------------------------------------------------------------------------
def init_params(key, *, width, layers, patch, res, output_dim):
    scale = width ** -0.5
    keys = iter(jax.random.split(key, 8 + layers * 8))
    nk = lambda: next(keys)

    params = {}
    params["conv_w"] = 0.02 * jax.random.normal(nk(), (width, 3, patch, patch), jnp.float32)
    params["cls"] = scale * jax.random.normal(nk(), (width,), jnp.float32)
    n_patches = (res // patch) ** 2
    params["pos"] = scale * jax.random.normal(nk(), (n_patches + 1, width), jnp.float32)
    params["ln_pre_w"] = jnp.ones((1, width), jnp.float32)
    params["ln_pre_b"] = jnp.zeros((1, width), jnp.float32)
    params["ln_post_w"] = jnp.ones((1, width), jnp.float32)
    params["ln_post_b"] = jnp.zeros((1, width), jnp.float32)
    params["proj"] = scale * jax.random.normal(nk(), (width, output_dim), jnp.float32)

    blocks = []
    for _ in range(layers):
        blk = {
            "ln1_w": jnp.ones((1, width), jnp.float32),
            "ln1_b": jnp.zeros((1, width), jnp.float32),
            "wqkv": 0.02 * jax.random.normal(nk(), (width, 3 * width), jnp.float32),
            "bqkv": jnp.zeros((1, 3 * width), jnp.float32),
            "wo": 0.02 * jax.random.normal(nk(), (width, width), jnp.float32),
            "bo": jnp.zeros((1, width), jnp.float32),
            "ln2_w": jnp.ones((1, width), jnp.float32),
            "ln2_b": jnp.zeros((1, width), jnp.float32),
            "wfc": 0.02 * jax.random.normal(nk(), (width, 4 * width), jnp.float32),
            "bfc": jnp.zeros((1, 4 * width), jnp.float32),
            "wpr": 0.02 * jax.random.normal(nk(), (4 * width, width), jnp.float32),
            "bpr": jnp.zeros((1, width), jnp.float32),
        }
        blocks.append(blk)
    params["blocks"] = blocks
    return params


# ----------------------------------------------------------------------------
# Forward pass (VisualTransformer.forward with mask_ratio == 0.0)
# ----------------------------------------------------------------------------
def vit_forward(x, params, *, patch, heads, width, compute_dtype=jnp.bfloat16):
    in_dtype = x.dtype
    cdt = compute_dtype if compute_dtype is not None else in_dtype
    B, C, R, _ = x.shape
    G = R // patch
    D = width

    # conv1 (kernel=stride=patch, no bias) == patch extraction + GEMM.
    # Patch flatten order (c, kh, kw) matches the conv weight flatten order.
    patches = (
        x.reshape(B, C, G, patch, G, patch)
        .transpose(0, 2, 4, 1, 3, 5)
        .reshape(B * G * G, C * patch * patch)
    )
    wconv = params["conv_w"].reshape(width, C * patch * patch).T
    # pad M to a sublane multiple and the contraction dim to a lane multiple
    # (zero padding -> bit-identical GEMM result).
    M, K = patches.shape
    Mp, Kp = _round_up(M, 8), _round_up(K, 128)
    patches = jnp.pad(patches, ((0, Mp - M), (0, Kp - K))).astype(cdt)
    wconv = jnp.pad(wconv, ((0, Kp - K), (0, 0))).astype(cdt)
    emb = pallas_matmul(patches, wconv)[:M].reshape(B, G * G, width)

    # class token + token-axis padding (pads masked in attention, discarded at end)
    S = G * G + 1
    S_pad = _round_up(S, 128) if S > 64 else _round_up(S, 8)
    cls_tok = jnp.broadcast_to(params["cls"].astype(cdt), (B, 1, width))
    h = jnp.concatenate([cls_tok, emb], axis=1)                 # (B, S, D)
    h = jnp.pad(h, ((0, 0), (0, S_pad - S), (0, 0)))
    pos = jnp.pad(params["pos"], ((0, S_pad - S), (0, 0)))      # f32, added in-kernel

    # TODO(synk): random_masking (mask_ratio != 0) needs data-dependent argsort/gather; not implemented.

    # positional-embedding add fused with ln_pre (saves one (B,S,D) HBM pass)
    h = pallas_pos_layernorm(h, pos, params["ln_pre_w"], params["ln_pre_b"])

    # transformer; PyTorch's (S,B,D) permute is layout-only (no mask), so (B,S,D) is equivalent.
    # TODO(synk): cross-pallas_call weight prefetch (P10) of layer L+1 while layer L computes.
    for blk in params["blocks"]:
        q2, k2, v2 = pallas_ln_qkv(
            h.reshape(B * S_pad, D), blk["ln1_w"], blk["ln1_b"],
            blk["wqkv"].astype(cdt), blk["bqkv"],
        )
        h = pallas_attention(
            h, q2.reshape(B, S_pad, D), k2.reshape(B, S_pad, D), v2.reshape(B, S_pad, D),
            blk["wo"].astype(cdt), blk["bo"], n_head=heads, kv_len=S,
        )
        h = pallas_mlp(
            h.reshape(B * S_pad, D), blk["ln2_w"], blk["ln2_b"],
            blk["wfc"].astype(cdt), blk["bfc"],
            blk["wpr"].astype(cdt), blk["bpr"],
        ).reshape(B, S_pad, D)

    # ln_post on the class token (never a pad row), then projection.
    out = pallas_head(h[:, 0, :], params["ln_post_w"], params["ln_post_b"],
                      params["proj"].astype(cdt))
    return out.astype(in_dtype)


# ----------------------------------------------------------------------------
if __name__ == "__main__":
    B = 2
    INPUT_RES = 16
    PATCH = 4
    WIDTH = 32
    LAYERS = 2
    HEADS = 4
    OUTPUT_DIM = 16

    root = jax.random.PRNGKey(0)
    kparam, kx = jax.random.split(root)
    params = init_params(
        kparam, width=WIDTH, layers=LAYERS, patch=PATCH, res=INPUT_RES, output_dim=OUTPUT_DIM
    )
    x = jax.random.normal(kx, (B, 3, INPUT_RES, INPUT_RES), jnp.float32)

    out = vit_forward(x, params, patch=PATCH, heads=HEADS, width=WIDTH)
    out = jax.block_until_ready(out)
    assert out.shape == (B, OUTPUT_DIM), out.shape
    assert jnp.all(jnp.isfinite(out))
    print("KERNEL_OK")
</pallas_src>

<mosaic_0001>
module attributes {stable_mosaic.version = 11 : i64} {
  func.func @_matmul_kernel(%arg0: i32, %arg1: i32, %arg2: i32, %arg3: memref<32x128xbf16, #tpu.memory_space<vmem>>, %arg4: memref<128x32xbf16, #tpu.memory_space<vmem>>, %arg5: memref<32x32xbf16, #tpu.memory_space<vmem>>, %arg6: memref<32x32xf32, #tpu.memory_space<vmem>>) attributes {dimension_semantics = [#tpu.dimension_semantics<parallel>, #tpu.dimension_semantics<parallel>, #tpu.dimension_semantics<arbitrary>], iteration_bounds = array<i64: 1, 1, 1>, scalar_prefetch = 0 : i64, scratch_operands = 1 : i64, tpu.core_type = #tpu.core_type<tc>, window_params = [{transform_indices = @transform_0, window_bounds = array<i64: 32, 128>}, {transform_indices = @transform_1, window_bounds = array<i64: 128, 32>}, {transform_indices = @transform_2, window_bounds = array<i64: 32, 32>}]} {
    %c0_i32 = arith.constant 0 : i32
    %0 = arith.cmpi eq, %arg2, %c0_i32 : i32
    %1 = arith.extui %0 : i1 to i32
    %c0_i32_0 = arith.constant 0 : i32
    %2 = arith.cmpi ne, %1, %c0_i32_0 : i32
    scf.if %2 {
      %cst_10 = arith.constant 0.000000e+00 : f32
      %12 = vector.broadcast %cst_10 : f32 to vector<32x32xf32>
      %c0_11 = arith.constant 0 : index
      %c0_12 = arith.constant 0 : index
      %13 = vector.load %arg6[%c0_11, %c0_12] : memref<32x32xf32, #tpu.memory_space<vmem>>, vector<32x32xf32>
      tpu.vector_store %arg6[%c0_11, %c0_12], %12 {strides = array<i32>} : memref<32x32xf32, #tpu.memory_space<vmem>>, vector<32x32xf32>,
    } else {
    }
    %c0 = arith.constant 0 : index
    %c0_1 = arith.constant 0 : index
    %3 = vector.load %arg6[%c0, %c0_1] : memref<32x32xf32, #tpu.memory_space<vmem>>, vector<32x32xf32>
    %c0_2 = arith.constant 0 : index
    %c0_3 = arith.constant 0 : index
    %4 = vector.load %arg3[%c0_2, %c0_3] : memref<32x128xbf16, #tpu.memory_space<vmem>>, vector<32x128xbf16>
    %c0_4 = arith.constant 0 : index
    %c0_5 = arith.constant 0 : index
    %5 = vector.load %arg4[%c0_4, %c0_5] : memref<128x32xbf16, #tpu.memory_space<vmem>>, vector<128x32xbf16>
    %cst = arith.constant dense<0.000000e+00> : vector<32x32xf32>
    %6 = tpu.matmul %4, %5, %cst {dimension_numbers = #tpu.dot_dimension_numbers<[1], [0], [0], [1], [0, 0, 1, 1], [], []>} : vector<32x128xbf16>, vector<128x32xbf16>, vector<32x32xf32> -> vector<32x32xf32>
    %7 = arith.addf %3, %6 : vector<32x32xf32>
    %c0_6 = arith.constant 0 : index
    %c0_7 = arith.constant 0 : index
    %8 = vector.load %arg6[%c0_6, %c0_7] : memref<32x32xf32, #tpu.memory_space<vmem>>, vector<32x32xf32>
    tpu.vector_store %arg6[%c0_6, %c0_7], %7 {strides = array<i32>} : memref<32x32xf32, #tpu.memory_space<vmem>>, vector<32x32xf32>,
    %c0_i32_8 = arith.constant 0 : i32
    %9 = arith.cmpi eq, %arg2, %c0_i32_8 : i32
    %10 = arith.extui %9 : i1 to i32
    %c0_i32_9 = arith.constant 0 : i32
    %11 = arith.cmpi ne, %10, %c0_i32_9 : i32
    scf.if %11 {
      %c0_10 = arith.constant 0 : index
      %c0_11 = arith.constant 0 : index
      %12 = vector.load %arg6[%c0_10, %c0_11] : memref<32x32xf32, #tpu.memory_space<vmem>>, vector<32x32xf32>
      %13 = arith.truncf %12 : vector<32x32xf32> to vector<32x32xbf16>
      %c0_12 = arith.constant 0 : index
      %c0_13 = arith.constant 0 : index
      %14 = vector.load %arg5[%c0_12, %c0_13] : memref<32x32xbf16, #tpu.memory_space<vmem>>, vector<32x32xbf16>
      tpu.vector_store %arg5[%c0_12, %c0_13], %13 {strides = array<i32>} : memref<32x32xbf16, #tpu.memory_space<vmem>>, vector<32x32xbf16>,
    } else {
    }
    return
  }
  func.func @transform_0(%arg0: i32, %arg1: i32, %arg2: i32) -> (i32, i32) {
    %c0_i32 = arith.constant 0 : i32
    return %arg0, %arg2 : i32, i32
  }
  func.func @transform_1(%arg0: i32, %arg1: i32, %arg2: i32) -> (i32, i32) {
    %c0_i32 = arith.constant 0 : i32
    return %arg2, %arg1 : i32, i32
  }
  func.func @transform_2(%arg0: i32, %arg1: i32, %arg2: i32) -> (i32, i32) {
    %c0_i32 = arith.constant 0 : i32
    return %arg0, %arg1 : i32, i32
  }
}

</mosaic_0001>

<llo_original>
// kernel: tpu_custom_call.1
$region0: #{tpu_custom_call.1}
  #allocation0 [shape = 'u32[]', space=smem, size = 0x4, offset = 0x4, fixed_abs, tag = 'smem constant byte address 0x4 - core index']
  #allocation1 [shape = 'u32[72,128]{1,0:T(1,128)}', space=vmem, size = 0x9000, scoped, tag = 'internal scratch']
  #allocation2 [shape = 'f32[32,32]{1,0:T(8,128)}', space=vmem, size = 0x4000, scoped, tag = 'scratch operand']
  %s0 = inlined_call_operand.vmem [shape: bf16[32,128], index: 0, kind: input, shape index: {}]
  %s1 = inlined_call_operand.vmem [shape: bf16[128,32], index: 1, kind: input, shape index: {}]
  %s2 = inlined_call_operand.hbm [shape: bf16[32,32], index: 2, kind: output, shape index: {}]
  %s3 = sld [smem:[#allocation0]]
  $region26: #{tpu_custom_call.1} parent=0
    _
  %s5 = ssub.s32 1, %s3
  %s6 = scalar_select 0, %s5, %s3
  $region1: #{tpu_custom_call.1} parent=0
    #allocation3 [shape = 'u8[8192]{0}', space=vmem, size = 0x2000, scoped, tag = 'output window, operand 0, single buffered']
    #allocation4 [shape = 's32[1]{0}', space=sflag, size = 0x4, scoped, tag = 'scoped memory for tpu_custom_call.1']
    %7 = vsyncpa [#allocation4], 0
    // Predicated region
    $region2: #{tpu_custom_call.1} parent=1 // pred_check
      _
    $region3: #{tpu_custom_call.1} parent=1 // pred_check_branch
      %9 = sbr.rel (0) target = $region5
    $region4: #{tpu_custom_call.1} parent=1 // pred_region
      _
    $region5: #{tpu_custom_call.1} parent=1 // pred_fallthru
      _
    // Predicated region
    $region6: #{tpu_custom_call.1} parent=1 // pred_check
      _
    $region7: #{tpu_custom_call.1} parent=1 // pred_check_branch
      %11 = sbr.rel (0) target = $region9
    $region8: #{tpu_custom_call.1} parent=1 // pred_region
      _
    $region9: #{tpu_custom_call.1} parent=1 // pred_fallthru
      _
    %p12 = scmp.eq.s32.totalorder 0, 0
    // Predicated region
    $region10: #{tpu_custom_call.1} parent=1 // pred_check
      %p13 = pneg %p12
    $region11: #{tpu_custom_call.1} parent=1 // pred_check_branch
      %15 = sbr.rel (%p13) target = $region13
    $region12: #{tpu_custom_call.1} parent=1 // pred_region
      %vm16 = vcmask 261120
      %17 = vst.msk [vmem:[#allocation2] sm:$0xff] %vm16, 0.0
      %18 = vst.msk [vmem:[#allocation2 + $0x8] sm:$0xff] %vm16, 0.0
      %19 = vst.msk [vmem:[#allocation2 + $0x10] sm:$0xff] %vm16, 0.0
      %20 = vst.msk [vmem:[#allocation2 + $0x18] sm:$0xff] %vm16, 0.0
    $region13: #{tpu_custom_call.1} parent=1 // pred_fallthru
      _
    %v21 = vld [vmem:[#allocation2] sm:$0xff]
    %v22 = vld [vmem:[#allocation2 + $0x8] sm:$0xff]
    %v23 = vld [vmem:[#allocation2 + $0x10] sm:$0xff]
    %v24 = vld [vmem:[#allocation2 + $0x18] sm:$0xff]
    %v25 = vld [vmem:[%s0] sm:$0xf]
    %v26 = vld [vmem:[%s0 + $0x4] sm:$0xf]
    %v27 = vld [vmem:[%s0 + $0x8] sm:$0xf]
    %v28 = vld [vmem:[%s0 + $0xc] sm:$0xf]
    %v29 = vld [vmem:[%s1] sm:$0xf]
    %v30 = vld [vmem:[%s1 + $0x4] sm:$0xf]
    %v31 = vld [vmem:[%s1 + $0x8] sm:$0xf]
    %v32 = vld [vmem:[%s1 + $0xc] sm:$0xf]
    %v33 = vld [vmem:[%s1 + $0x10] sm:$0xf]
    %v34 = vld [vmem:[%s1 + $0x14] sm:$0xf]
    %v35 = vld [vmem:[%s1 + $0x18] sm:$0xf]
    %v36 = vld [vmem:[%s1 + $0x1c] sm:$0xf]
    %v37 = vld [vmem:[%s1 + $0x20] sm:$0xf]
    %v38 = vld [vmem:[%s1 + $0x24] sm:$0xf]
    %v39 = vld [vmem:[%s1 + $0x28] sm:$0xf]
    %v40 = vld [vmem:[%s1 + $0x2c] sm:$0xf]
    %v41 = vld [vmem:[%s1 + $0x30] sm:$0xf]
    %v42 = vld [vmem:[%s1 + $0x34] sm:$0xf]
    %v43 = vld [vmem:[%s1 + $0x38] sm:$0xf]
    %v44 = vld [vmem:[%s1 + $0x3c] sm:$0xf]
    %v49 = vunpack.c.l.b16 %v25
    %v50 = vunpack.c.l.b16 %v26
    %v51 = vunpack.c.l.b16 %v27
    %v52 = vunpack.c.l.b16 %v28
    %v53 = vpack.c.b16 %v50, %v49
    %v54 = vpack.c.b16 %v52, %v51
    %v73 = vunpack.c.l.b16 %v29
    %v74 = vunpack.c.l.b16 %v30
    %v75 = vunpack.c.l.b16 %v31
    %v76 = vunpack.c.l.b16 %v32
    %v77 = vunpack.c.l.b16 %v33
    %v78 = vunpack.c.l.b16 %v34
    %v79 = vunpack.c.l.b16 %v35
    %v80 = vunpack.c.l.b16 %v36
    %v81 = vunpack.c.l.b16 %v37
    %v82 = vunpack.c.l.b16 %v38
    %v83 = vunpack.c.l.b16 %v39
    %v84 = vunpack.c.l.b16 %v40
    %v85 = vunpack.c.l.b16 %v41
    %v86 = vunpack.c.l.b16 %v42
    %v87 = vunpack.c.l.b16 %v43
    %v88 = vunpack.c.l.b16 %v44
    %v89 = vpack.c.b16 %v74, %v73
    %v90 = vpack.c.b16 %v76, %v75
    %v91 = vpack.c.b16 %v78, %v77
    %v92 = vpack.c.b16 %v80, %v79
    %v93 = vpack.c.b16 %v82, %v81
    %v94 = vpack.c.b16 %v84, %v83
    %v95 = vpack.c.b16 %v86, %v85
    %v96 = vpack.c.b16 %v88, %v87
    %105 = vmatpush.bf16.msra.mxu0 %v96
    %106 = vmatpush.bf16.msra.mxu0 %v95
    %107 = vmatpush.bf16.msra.mxu0 %v94
    %108 = vmatpush.bf16.msra.mxu0 %v93
    %109 = vmatpush.bf16.msra.mxu0 %v92
    %110 = vmatpush.bf16.msra.mxu0 %v91
    %111 = vmatpush.bf16.msra.mxu0 %v90
    %112 = vmatpush.bf16.msra.mxu0 %v89
    %113 = vmatmul.bf16.gmra.mxu0 %v53
    %v114 = vpop.f32.mrf.mxu0
    %v115 = vadd.f32 0.0, %v114
    %v116 = vpop.f32.mrf.mxu0
    %v117 = vadd.f32 0.0, %v116
    %118 = vmatmul.bf16.gmra.mxu0 %v54
    %v119 = vpop.f32.mrf.mxu0
    %v120 = vadd.f32 0.0, %v119
    %v121 = vpop.f32.mrf.mxu0
    %v122 = vadd.f32 0.0, %v121
    %123 = vdwg.mxu0
    %v124 = vadd.f32 %v21, %v115
    %v125 = vadd.f32 %v22, %v117
    %v126 = vadd.f32 %v23, %v120
    %v127 = vadd.f32 %v24, %v122
    %vm128 = vcmask 261120
    %129 = vst.msk [vmem:[#allocation2] sm:$0xff] %vm128, %v124
    %130 = vst.msk [vmem:[#allocation2 + $0x8] sm:$0xff] %vm128, %v125
    %131 = vst.msk [vmem:[#allocation2 + $0x10] sm:$0xff] %vm128, %v126
    %132 = vst.msk [vmem:[#allocation2 + $0x18] sm:$0xff] %vm128, %v127
    // Predicated region
    $region14: #{tpu_custom_call.1} parent=1 // pred_check
      %p133 = pneg %p12
    $region15: #{tpu_custom_call.1} parent=1 // pred_check_branch
      %135 = sbr.rel (%p133) target = $region17
    $region16: #{tpu_custom_call.1} parent=1 // pred_region
      %v136 = vld [vmem:[#allocation2] sm:$0xff]
      %v137 = vld [vmem:[#allocation2 + $0x8] sm:$0xff]
      %v138 = vld [vmem:[#allocation2 + $0x10] sm:$0xff]
      %v139 = vld [vmem:[#allocation2 + $0x18] sm:$0xff]
      %v140 = vpack.c.bf16 %v136, %v136
      %v141 = vpack.c.bf16 %v137, %v137
      %v142 = vpack.c.bf16 %v138, %v138
      %v143 = vpack.c.bf16 %v139, %v139
      %vm144 = vcmask 257024
      %145 = vst.msk [vmem:[#allocation3] sm:$0xf] %vm144, %v140
      %146 = vst.msk [vmem:[#allocation3 + $0x4] sm:$0xf] %vm144, %v141
      %147 = vst.msk [vmem:[#allocation3 + $0x8] sm:$0xf] %vm144, %v142
      %148 = vst.msk [vmem:[#allocation3 + $0xc] sm:$0xf] %vm144, %v143
    $region17: #{tpu_custom_call.1} parent=1 // pred_fallthru
      _
    // Predicated region
    $region18: #{tpu_custom_call.1} parent=1 // pred_check
      _
    $region19: #{tpu_custom_call.1} parent=1 // pred_check_branch
      %150 = sbr.rel (0) target = $region21
    $region20: #{tpu_custom_call.1} parent=1 // pred_region
      %152 = vsyncadd [#allocation4], 0
      %s153 = sshll.u32 [#allocation3], 4
      %s154 = int_to_ptr.vmem [resolvable:$true] %s153
      %s155 = sshll.u32 %s2, 4
      %s156 = int_to_ptr.hbm [resolvable:$true] %s155
      %161 = dma.vmem_to_hbm [thread:$0]  %s154, 256, %s156, [#allocation4], 64, 64, 4
    $region21: #{tpu_custom_call.1} parent=1 // pred_fallthru
      _
    // Predicated region
    $region22: #{tpu_custom_call.1} parent=1 // pred_check
      _
    $region23: #{tpu_custom_call.1} parent=1 // pred_check_branch
      %163 = sbr.rel (0) target = $region25
    $region24: #{tpu_custom_call.1} parent=1 // pred_region
      %165 = dma.done [#allocation4], 256
    $region25: #{tpu_custom_call.1} parent=1 // pred_fallthru
      _
    %166 = vsyncpa [#allocation4], 1

</llo_original>
